<compile_context>
chip_gen: v5e
topology: v5e:2x2
jax: 0.10.0
libtpu: 0.0.40
codegen_flags: <defaults>
</compile_context>

<pallas_src>
import functools

import jax
import jax.numpy as jnp
from jax.experimental import pallas as pl
from jax.experimental.pallas import tpu as pltpu


def _ltdc_kernel(mask_ref, lw_ref, hw_ref, x_ref, o_ref, *, patch, inv_count):
    x = x_ref[...].astype(jnp.float32)        # (B, HW_P) lane-dense rows
    masks = mask_ref[...]                     # (P, HW_P) 0/1 column-group masks
    lw = lw_ref[...]                          # (B, P) per-row l weights
    hw = hw_ref[...]                          # (B, P) per-row h weights

    coeff = jnp.zeros_like(x)
    bias = jnp.zeros_like(x)
    for p2 in range(patch):                   # static unroll, patch is tiny
        m = masks[p2:p2 + 1, :]                                       # (1, HW_P)
        mean = jnp.sum(x * m, axis=-1, keepdims=True) * inv_count     # (B, 1) block mean
        l_q = lw[:, p2:p2 + 1]                                        # (B, 1)
        h_q = hw[:, p2:p2 + 1]
        coeff = coeff + m * h_q                        # "high" (residual) weight per lane
        bias = bias + m * (mean * (l_q - h_q))         # mean*l_q - mean*h_q contribution
    o_ref[...] = (x * coeff + bias).astype(o_ref.dtype)


def _choose_rows_per_block(num_rows, row_bytes, target_bytes=2 << 20):
    """Largest row-count B that divides num_rows, is a multiple of 8 (or full extent),
    stays near the VMEM target, and keeps >= 2 grid steps when possible (v7x megacore)."""
    cap = max(1, target_bytes // max(row_bytes, 1))
    if num_rows >= 16:
        cap = min(cap, num_rows // 2)
    cap = min(cap, num_rows)
    for b in range(cap, 0, -1):
        if num_rows % b == 0 and (b % 8 == 0 or b == num_rows):
            return b
    return num_rows  # full-extent block always satisfies the layout rules


def low_threshold_dc(x, l, h, patch_size=2):
    """x: (N, C, H, W); l, h: (C * patch_size**2,) learnable per-(channel, block) weights."""
    N, C, H, W = x.shape
    P = patch_size
    assert H % P == 0 and W % P == 0, "rearrange in the module requires H, W divisible by patch_size"
    assert l.shape == (C * P * P,) and h.shape == (C * P * P,)
    HP, WP = H // P, W // P
    hw_p = HP * W                               # lanes per (n, c, p1) row-group
    num_rows = N * C * P

    xf = x.reshape(num_rows, hw_p)              # free reshape (contiguous row-major)
    # Per-row (= per (n, c, p1)) parameter pairs over p2: (C*P, P) table tiled over batch.
    l_rows = jnp.tile(l.astype(jnp.float32).reshape(C * P, P), (N, 1))   # (num_rows, P)
    h_rows = jnp.tile(h.astype(jnp.float32).reshape(C * P, P), (N, 1))   # (num_rows, P)
    # 0/1 masks selecting each p2 column-group on the flattened (HP, W) lane axis.
    col_group = (jnp.arange(hw_p) % W) // WP
    masks = (col_group[None, :] == jnp.arange(P)[:, None]).astype(jnp.float32)  # (P, hw_p)

    B = _choose_rows_per_block(num_rows, hw_p * x.dtype.itemsize)
    grid = (num_rows // B,)
    # TODO(synk): extremely large planes (one (H/P)*W row approaching the VMEM budget) would
    # need an extra lane-dimension tile + two-pass mean; not needed for feature-map sizes.

    kernel = functools.partial(_ltdc_kernel, patch=P, inv_count=1.0 / (HP * WP))
    out = pl.pallas_call(
        kernel,
        out_shape=jax.ShapeDtypeStruct((num_rows, hw_p), x.dtype),
        grid=grid,
        in_specs=[
            pl.BlockSpec((P, hw_p), lambda i: (0, 0)),     # column-group masks (resident)
            pl.BlockSpec((B, P), lambda i: (i, 0)),        # l per row-group
            pl.BlockSpec((B, P), lambda i: (i, 0)),        # h per row-group
            pl.BlockSpec((B, hw_p), lambda i: (i, 0)),     # x rows (lane-dense)
        ],
        out_specs=pl.BlockSpec((B, hw_p), lambda i: (i, 0)),
        compiler_params=pltpu.CompilerParams(dimension_semantics=("parallel",)),
    )(masks, l_rows, h_rows, xf)
    return out.reshape(N, C, H, W)


def _reference(x, l, h, patch_size=2):
    """Plain-JAX transcription of the PyTorch forward (einops rearranges spelled out)."""
    N, C, H, W = x.shape
    P = patch_size
    px = x.reshape(N, C, P, H // P, P, W // P)                     # b c p1 w1 p2 w2
    px = px.transpose(0, 1, 2, 4, 3, 5).reshape(N, C * P * P, H // P, W // P)
    low = px.mean(axis=(2, 3), keepdims=True)
    out = (px - low) * h[None, :, None, None] + low * l[None, :, None, None]
    out = out.reshape(N, C, P, P, H // P, W // P).transpose(0, 1, 2, 4, 3, 5)
    return out.reshape(N, C, H, W)


if __name__ == "__main__":
    N, C, H, W = 2, 4, 16, 16
    P = 2

    key = jax.random.PRNGKey(0)
    kx, kl, kh = jax.random.split(key, 3)
    x = jax.random.normal(kx, (N, C, H, W), dtype=jnp.float32)
    # The module __init__ zero-inits both parameters (output would be identically zero);
    # use deterministic random values so the correctness check is meaningful.
    l_param = jax.random.normal(kl, (C * P * P,), dtype=jnp.float32)
    h_param = jax.random.normal(kh, (C * P * P,), dtype=jnp.float32)

    out = jax.block_until_ready(low_threshold_dc(x, l_param, h_param, patch_size=P))
    ref = _reference(x, l_param, h_param, patch_size=P)

    assert out.shape == (N, C, H, W)
    assert jnp.allclose(out, ref, rtol=1e-5, atol=1e-5), "mismatch vs reference"
    print("KERNEL_OK")
</pallas_src>

<mosaic_0001>
module attributes {stable_mosaic.version = 11 : i64} {
  func.func @_ltdc_kernel(%arg0: i32, %arg1: memref<2x128xf32, #tpu.memory_space<vmem>>, %arg2: memref<8x2xf32, #tpu.memory_space<vmem>>, %arg3: memref<8x2xf32, #tpu.memory_space<vmem>>, %arg4: memref<8x128xf32, #tpu.memory_space<vmem>>, %arg5: memref<8x128xf32, #tpu.memory_space<vmem>>) attributes {dimension_semantics = [#tpu.dimension_semantics<parallel>], iteration_bounds = array<i64: 2>, scalar_prefetch = 0 : i64, scratch_operands = 0 : i64, tpu.core_type = #tpu.core_type<tc>, window_params = [{pipeline_mode = #tpu.pipeline_mode<synchronous>, transform_indices = @transform_0, window_bounds = array<i64: 2, 128>}, {transform_indices = @transform_1, window_bounds = array<i64: 8, 2>}, {transform_indices = @transform_2, window_bounds = array<i64: 8, 2>}, {transform_indices = @transform_3, window_bounds = array<i64: 8, 128>}, {transform_indices = @transform_4, window_bounds = array<i64: 8, 128>}]} {
    %c0 = arith.constant 0 : index
    %c0_0 = arith.constant 0 : index
    %0 = vector.load %arg4[%c0, %c0_0] : memref<8x128xf32, #tpu.memory_space<vmem>>, vector<8x128xf32>
    %c0_1 = arith.constant 0 : index
    %c0_2 = arith.constant 0 : index
    %1 = vector.load %arg1[%c0_1, %c0_2] : memref<2x128xf32, #tpu.memory_space<vmem>>, vector<2x128xf32>
    %c0_3 = arith.constant 0 : index
    %c0_4 = arith.constant 0 : index
    %2 = vector.load %arg2[%c0_3, %c0_4] : memref<8x2xf32, #tpu.memory_space<vmem>>, vector<8x2xf32>
    %c0_5 = arith.constant 0 : index
    %c0_6 = arith.constant 0 : index
    %3 = vector.load %arg3[%c0_5, %c0_6] : memref<8x2xf32, #tpu.memory_space<vmem>>, vector<8x2xf32>
    %cst = arith.constant 0.000000e+00 : f32
    %4 = vector.broadcast %cst : f32 to vector<8x128xf32>
    %cst_7 = arith.constant 0.000000e+00 : f32
    %5 = vector.broadcast %cst_7 : f32 to vector<8x128xf32>
    %6 = vector.extract_strided_slice %1 {offsets = [0, 0], sizes = [1, 128], strides = [1, 1]} : vector<2x128xf32> to vector<1x128xf32>
    %7 = vector.broadcast %6 : vector<1x128xf32> to vector<8x128xf32>
    %8 = arith.mulf %0, %7 : vector<8x128xf32>
    %cst_8 = arith.constant dense<0.000000e+00> : vector<8xf32>
    %9 = vector.multi_reduction <add>, %8, %cst_8 [1] : vector<8x128xf32> to vector<8xf32>
    %10 = vector.shape_cast %9 : vector<8xf32> to vector<8x1xf32>
    %cst_9 = arith.constant 1.562500e-02 : f32
    %11 = vector.broadcast %cst_9 : f32 to vector<8x1xf32>
    %12 = arith.mulf %10, %11 : vector<8x1xf32>
    %13 = vector.extract_strided_slice %2 {offsets = [0, 0], sizes = [8, 1], strides = [1, 1]} : vector<8x2xf32> to vector<8x1xf32>
    %14 = vector.extract_strided_slice %3 {offsets = [0, 0], sizes = [8, 1], strides = [1, 1]} : vector<8x2xf32> to vector<8x1xf32>
    %15 = vector.broadcast %6 : vector<1x128xf32> to vector<8x128xf32>
    %16 = vector.broadcast %14 : vector<8x1xf32> to vector<8x128xf32>
    %17 = arith.mulf %15, %16 : vector<8x128xf32>
    %18 = arith.addf %4, %17 : vector<8x128xf32>
    %19 = arith.subf %13, %14 : vector<8x1xf32>
    %20 = arith.mulf %12, %19 : vector<8x1xf32>
    %21 = vector.broadcast %6 : vector<1x128xf32> to vector<8x128xf32>
    %22 = vector.broadcast %20 : vector<8x1xf32> to vector<8x128xf32>
    %23 = arith.mulf %21, %22 : vector<8x128xf32>
    %24 = arith.addf %5, %23 : vector<8x128xf32>
    %25 = vector.extract_strided_slice %1 {offsets = [1, 0], sizes = [1, 128], strides = [1, 1]} : vector<2x128xf32> to vector<1x128xf32>
    %26 = vector.broadcast %25 : vector<1x128xf32> to vector<8x128xf32>
    %27 = arith.mulf %0, %26 : vector<8x128xf32>
    %cst_10 = arith.constant dense<0.000000e+00> : vector<8xf32>
    %28 = vector.multi_reduction <add>, %27, %cst_10 [1] : vector<8x128xf32> to vector<8xf32>
    %29 = vector.shape_cast %28 : vector<8xf32> to vector<8x1xf32>
    %cst_11 = arith.constant 1.562500e-02 : f32
    %30 = vector.broadcast %cst_11 : f32 to vector<8x1xf32>
    %31 = arith.mulf %29, %30 : vector<8x1xf32>
    %32 = vector.extract_strided_slice %2 {offsets = [0, 1], sizes = [8, 1], strides = [1, 1]} : vector<8x2xf32> to vector<8x1xf32>
    %33 = vector.extract_strided_slice %3 {offsets = [0, 1], sizes = [8, 1], strides = [1, 1]} : vector<8x2xf32> to vector<8x1xf32>
    %34 = vector.broadcast %25 : vector<1x128xf32> to vector<8x128xf32>
    %35 = vector.broadcast %33 : vector<8x1xf32> to vector<8x128xf32>
    %36 = arith.mulf %34, %35 : vector<8x128xf32>
    %37 = arith.addf %18, %36 : vector<8x128xf32>
    %38 = arith.subf %32, %33 : vector<8x1xf32>
    %39 = arith.mulf %31, %38 : vector<8x1xf32>
    %40 = vector.broadcast %25 : vector<1x128xf32> to vector<8x128xf32>
    %41 = vector.broadcast %39 : vector<8x1xf32> to vector<8x128xf32>
    %42 = arith.mulf %40, %41 : vector<8x128xf32>
    %43 = arith.addf %24, %42 : vector<8x128xf32>
    %44 = arith.mulf %0, %37 : vector<8x128xf32>
    %45 = arith.addf %44, %43 : vector<8x128xf32>
    %c0_12 = arith.constant 0 : index
    %c0_13 = arith.constant 0 : index
    %46 = vector.load %arg5[%c0_12, %c0_13] : memref<8x128xf32, #tpu.memory_space<vmem>>, vector<8x128xf32>
    tpu.vector_store %arg5[%c0_12, %c0_13], %45 {strides = array<i32>} : memref<8x128xf32, #tpu.memory_space<vmem>>, vector<8x128xf32>,
    return
  }
  func.func @transform_0(%arg0: i32) -> (i32, i32) {
    %c0_i32 = arith.constant 0 : i32
    %c0_i32_0 = arith.constant 0 : i32
    %c0_i32_1 = arith.constant 0 : i32
    return %c0_i32, %c0_i32_0 : i32, i32
  }
  func.func @transform_1(%arg0: i32) -> (i32, i32) {
    %c0_i32 = arith.constant 0 : i32
    %c0_i32_0 = arith.constant 0 : i32
    return %arg0, %c0_i32 : i32, i32
  }
  func.func @transform_2(%arg0: i32) -> (i32, i32) {
    %c0_i32 = arith.constant 0 : i32
    %c0_i32_0 = arith.constant 0 : i32
    return %arg0, %c0_i32 : i32, i32
  }
  func.func @transform_3(%arg0: i32) -> (i32, i32) {
    %c0_i32 = arith.constant 0 : i32
    %c0_i32_0 = arith.constant 0 : i32
    return %arg0, %c0_i32 : i32, i32
  }
  func.func @transform_4(%arg0: i32) -> (i32, i32) {
    %c0_i32 = arith.constant 0 : i32
    %c0_i32_0 = arith.constant 0 : i32
    return %arg0, %c0_i32 : i32, i32
  }
}

</mosaic_0001>

<llo_original>
// kernel: tpu_custom_call.1
$region0: #{tpu_custom_call.1}
  #allocation0 [shape = 'u32[]', space=smem, size = 0x4, offset = 0x4, fixed_abs, tag = 'smem constant byte address 0x4 - core index']
  #allocation1 [shape = 'u32[72,128]{1,0:T(1,128)}', space=vmem, size = 0x9000, scoped, tag = 'internal scratch']
  %s0 = inlined_call_operand.vmem [shape: f32[2,128], index: 0, kind: input, shape index: {}]
  %s1 = inlined_call_operand.vmem [shape: f32[16,2], index: 1, kind: input, shape index: {}]
  %s2 = inlined_call_operand.vmem [shape: f32[16,2], index: 2, kind: input, shape index: {}]
  %s3 = inlined_call_operand.vmem [shape: f32[16,128], index: 3, kind: input, shape index: {}]
  %s4 = inlined_call_operand.hbm [shape: f32[16,128], index: 4, kind: output, shape index: {}]
  %s5 = sld [smem:[#allocation0]]
  $region49: #{tpu_custom_call.1} parent=0
    _
  %s7 = ssub.s32 1, %s5
  %s8 = scalar_select 0, %s7, %s5
  $region1: #{tpu_custom_call.1} parent=0
    #allocation2 [shape = 'u8[8192]{0}', space=vmem, size = 0x2000, scoped, tag = 'output window, operand 0']
    #allocation3 [shape = 's32[2]{0}', space=sflag, size = 0x8, scoped, tag = 'scoped memory for tpu_custom_call.1']
    %9 = vsyncpa [#allocation3], 0
    %s10 = scalar_lea.sflag [#allocation3], 1
    %11 = vsyncpa %s10, 0
    loop: start=0, step=1, limit=4
    $region2: #{tpu_custom_call.1} parent=1 // loop_pre_header
      _
    $region3: #{tpu_custom_call.1} parent=1 // loop_header
      %s13 = sphi 0, %s17
      %p14 = scmp.ge.s32.totalorder %s13, 4
      %s21 = sphi 0, %s21
      %s23 = sphi 0, %s21
      %s24 = sphi 0, %s23
      %s38 = sphi 0, %s24
      %s44 = sphi 0, %s46
      %s47 = sphi 0, %s44
      %s48 = sphi 0, %s47
      %s64 = sphi 0, %s48
      %s70 = sphi 0, %s72
      %s73 = sphi 0, %s70
      %s74 = sphi 0, %s73
      %s90 = sphi 0, %s74
      %s96 = sphi 0, %s98
      %s99 = sphi 0, %s96
      %s100 = sphi 0, %s99
      %s116 = sphi 0, %s100
      %s122 = sphi 0, %s124
      %s125 = sphi 0, %s122
      %s126 = sphi 0, %s125
      %s142 = sphi 0, %s126
    $region4: #{tpu_custom_call.1} parent=1 // loop_header_branch
      %16 = sbr.rel (%p14) target = $region8
    $region5: #{tpu_custom_call.1} parent=1 // loop_body
      %s18 = ssub.s32 %s13, 1
      %s19 = ssub.s32 %s13, 2
      %s20 = sadd.s32 %s13, 1
      %s22 = sadd.s32 %s21, 1
      %p25 = scmp.eq.s32.totalorder %s13, 1
      %p26 = scmp.ne.s32.totalorder %s21, %s23
      %p27 = scmp.eq.s32.totalorder %s13, 0
      %p28 = por %p26, %p27
      %p29 = scmp.ne.s32.totalorder %s21, %s23
      %p30 = scmp.eq.s32.totalorder %s18, 1
      %p31 = por %p29, %p30
      %p32 = scmp.ne.s32.totalorder %s23, %s24
      %p33 = scmp.eq.s32.totalorder %s18, 0
      %p34 = por %p32, %p33
      %p35 = scmp.ne.s32.totalorder %s23, %s24
      %p36 = scmp.eq.s32.totalorder %s19, 1
      %p37 = por %p35, %p36
      %p39 = scmp.ne.s32.totalorder %s24, %s38
      %p40 = scmp.eq.s32.totalorder %s19, 0
      %p41 = por %p39, %p40
      %s42 = ssub.s32 %s13, %s20
      %p43 = scmp.eq.s32.totalorder %s42, 0
      %s45 = sadd.s32 %s44, 1
      %s46 = scalar_select %p43, %s44, %s45
      %p49 = pneg %p43
      %p50 = scmp.eq.s32.totalorder %s13, 1
      %p51 = por %p49, %p50
      %p52 = scmp.ne.s32.totalorder %s44, %s47
      %p53 = scmp.eq.s32.totalorder %s13, 0
      %p54 = por %p52, %p53
      %p55 = scmp.ne.s32.totalorder %s44, %s47
      %p56 = scmp.eq.s32.totalorder %s18, 1
      %p57 = por %p55, %p56
      %p58 = scmp.ne.s32.totalorder %s47, %s48
      %p59 = scmp.eq.s32.totalorder %s18, 0
      %p60 = por %p58, %p59
      %p61 = scmp.ne.s32.totalorder %s47, %s48
      %p62 = scmp.eq.s32.totalorder %s19, 1
      %p63 = por %p61, %p62
      %p65 = scmp.ne.s32.totalorder %s48, %s64
      %p66 = scmp.eq.s32.totalorder %s19, 0
      %p67 = por %p65, %p66
      %s68 = ssub.s32 %s13, %s20
      %p69 = scmp.eq.s32.totalorder %s68, 0
      %s71 = sadd.s32 %s70, 1
      %s72 = scalar_select %p69, %s70, %s71
      %p75 = pneg %p69
      %p76 = scmp.eq.s32.totalorder %s13, 1
      %p77 = por %p75, %p76
      %p78 = scmp.ne.s32.totalorder %s70, %s73
      %p79 = scmp.eq.s32.totalorder %s13, 0
      %p80 = por %p78, %p79
      %p81 = scmp.ne.s32.totalorder %s70, %s73
      %p82 = scmp.eq.s32.totalorder %s18, 1
      %p83 = por %p81, %p82
      %p84 = scmp.ne.s32.totalorder %s73, %s74
      %p85 = scmp.eq.s32.totalorder %s18, 0
      %p86 = por %p84, %p85
      %p87 = scmp.ne.s32.totalorder %s73, %s74
      %p88 = scmp.eq.s32.totalorder %s19, 1
      %p89 = por %p87, %p88
      %p91 = scmp.ne.s32.totalorder %s74, %s90
      %p92 = scmp.eq.s32.totalorder %s19, 0
      %p93 = por %p91, %p92
      %s94 = ssub.s32 %s13, %s20
      %p95 = scmp.eq.s32.totalorder %s94, 0
      %s97 = sadd.s32 %s96, 1
      %s98 = scalar_select %p95, %s96, %s97
      %p101 = pneg %p95
      %p102 = scmp.eq.s32.totalorder %s13, 1
      %p103 = por %p101, %p102
      %p104 = scmp.ne.s32.totalorder %s96, %s99
      %p105 = scmp.eq.s32.totalorder %s13, 0
      %p106 = por %p104, %p105
      %p107 = scmp.ne.s32.totalorder %s96, %s99
      %p108 = scmp.eq.s32.totalorder %s18, 1
      %p109 = por %p107, %p108
      %p110 = scmp.ne.s32.totalorder %s99, %s100
      %p111 = scmp.eq.s32.totalorder %s18, 0
      %p112 = por %p110, %p111
      %p113 = scmp.ne.s32.totalorder %s99, %s100
      %p114 = scmp.eq.s32.totalorder %s19, 1
      %p115 = por %p113, %p114
      %p117 = scmp.ne.s32.totalorder %s100, %s116
      %p118 = scmp.eq.s32.totalorder %s19, 0
      %p119 = por %p117, %p118
      %s120 = ssub.s32 %s13, %s20
      %p121 = scmp.eq.s32.totalorder %s120, 0
      %s123 = sadd.s32 %s122, 1
      %s124 = scalar_select %p121, %s122, %s123
      %p127 = pneg %p121
      %p128 = scmp.eq.s32.totalorder %s13, 1
      %p129 = por %p127, %p128
      %p130 = scmp.ne.s32.totalorder %s122, %s125
      %p131 = scmp.eq.s32.totalorder %s13, 0
      %p132 = por %p130, %p131
      %p133 = scmp.ne.s32.totalorder %s122, %s125
      %p134 = scmp.eq.s32.totalorder %s18, 1
      %p135 = por %p133, %p134
      %p136 = scmp.ne.s32.totalorder %s125, %s126
      %p137 = scmp.eq.s32.totalorder %s18, 0
      %p138 = por %p136, %p137
      %p139 = scmp.ne.s32.totalorder %s125, %s126
      %p140 = scmp.eq.s32.totalorder %s19, 1
      %p141 = por %p139, %p140
      %p143 = scmp.ne.s32.totalorder %s126, %s142
      %p144 = scmp.eq.s32.totalorder %s19, 0
      %p145 = por %p143, %p144
      %p146 = scmp.le.s32.totalorder 1, %s13
      %p147 = scmp.lt.s32.totalorder %s13, 3
      %p148 = pnand %p146, %p147
      %p149 = pneg %p148
      // Predicated region
      $region9: #{tpu_custom_call.1} parent=5 // pred_check
        _
      $region10: #{tpu_custom_call.1} parent=5 // pred_check_branch
        %151 = sbr.rel (%p148) target = $region12
      $region11: #{tpu_custom_call.1} parent=5 // pred_region
        %s152 = ssub.s32 %s13, 1
        // Predicated region
        $region13: #{tpu_custom_call.1} parent=11 // pred_check
          %p153 = pneg %p34
        $region14: #{tpu_custom_call.1} parent=11 // pred_check_branch
          %155 = sbr.rel (%p153) target = $region16
        $region15: #{tpu_custom_call.1} parent=11 // pred_region
          _
        $region16: #{tpu_custom_call.1} parent=11 // pred_fallthru
          _
      $region12: #{tpu_custom_call.1} parent=5 // pred_fallthru
        _
      %p156 = scmp.lt.s32.totalorder %s13, 2
      // Predicated region
      $region17: #{tpu_custom_call.1} parent=5 // pred_check
        %p157 = pneg %p156
      $region18: #{tpu_custom_call.1} parent=5 // pred_check_branch
        %159 = sbr.rel (%p157) target = $region20
      $region19: #{tpu_custom_call.1} parent=5 // pred_region
        // Predicated region
        $region21: #{tpu_custom_call.1} parent=19 // pred_check
          %p160 = pneg %p54
        $region22: #{tpu_custom_call.1} parent=19 // pred_check_branch
          %162 = sbr.rel (%p160) target = $region24
        $region23: #{tpu_custom_call.1} parent=19 // pred_region
          %p163 = scmp.lt.s32.totalorder %s13, 1
          %s164 = scalar_select %p163, %s13, 1
          %s165 = smul.addr %s164, 8
          %s166 = scalar_lea.vmem %s1, %s165
        $region24: #{tpu_custom_call.1} parent=19 // pred_fallthru
          _
        // Predicated region
        $region25: #{tpu_custom_call.1} parent=19 // pred_check
          %p167 = pneg %p80
        $region26: #{tpu_custom_call.1} parent=19 // pred_check_branch
          %169 = sbr.rel (%p167) target = $region28
        $region27: #{tpu_custom_call.1} parent=19 // pred_region
          %p170 = scmp.lt.s32.totalorder %s13, 1
          %s171 = scalar_select %p170, %s13, 1
          %s172 = smul.addr %s171, 8
          %s173 = scalar_lea.vmem %s2, %s172
        $region28: #{tpu_custom_call.1} parent=19 // pred_fallthru
          _
        // Predicated region
        $region29: #{tpu_custom_call.1} parent=19 // pred_check
          %p174 = pneg %p106
        $region30: #{tpu_custom_call.1} parent=19 // pred_check_branch
          %176 = sbr.rel (%p174) target = $region32
        $region31: #{tpu_custom_call.1} parent=19 // pred_region
          %p177 = scmp.lt.s32.totalorder %s13, 1
          %s178 = scalar_select %p177, %s13, 1
          %s179 = smul.addr %s178, 8
          %s180 = scalar_lea.vmem %s3, %s179
        $region32: #{tpu_custom_call.1} parent=19 // pred_fallthru
          _
      $region20: #{tpu_custom_call.1} parent=5 // pred_fallthru
        _
      %p181 = scmp.le.s32.totalorder 1, %s13
      %p182 = scmp.lt.s32.totalorder %s13, 3
      %p183 = pnand %p181, %p182
      %p184 = pneg %p183
      // Predicated region
      $region33: #{tpu_custom_call.1} parent=5 // pred_check
        _
      $region34: #{tpu_custom_call.1} parent=5 // pred_check_branch
        %186 = sbr.rel (%p183) target = $region36
      $region35: #{tpu_custom_call.1} parent=5 // pred_region
        %s187 = ssub.s32 %s13, 1
        %p188 = pneg %p34
        %p189 = pneg %p31
        %p190 = scmp.lt.s32.totalorder %s18, 1
        %s191 = scalar_select %p190, %s18, 1
        %s192 = smul.addr %s191, 8
        %s193 = scalar_lea.vmem %s1, %s192
        %p194 = pneg %p60
        %p195 = pneg %p57
        %p196 = scmp.lt.s32.totalorder %s18, 1
        %s197 = scalar_select %p196, %s18, 1
        %s198 = smul.addr %s197, 8
        %s199 = scalar_lea.vmem %s2, %s198
        %p200 = pneg %p86
        %p201 = pneg %p83
        %p202 = scmp.lt.s32.totalorder %s18, 1
        %s203 = scalar_select %p202, %s18, 1
        %s204 = smul.addr %s203, 8
        %s205 = scalar_lea.vmem %s3, %s204
        %p206 = pneg %p112
        %p207 = pneg %p109
        %p208 = pneg %p138
        %p209 = pneg %p135
        %s210 = sand.u32 %s125, 1
        %s211 = scalar_lea.sflag [#allocation3], %s210
        %s212 = sand.u32 %s125, 1
        %s213 = smul.addr %s212, 8
        %s214 = scalar_lea.vmem [#allocation2], %s213
        %p215 = scmp.lt.s32.totalorder %s18, 1
        %s216 = scalar_select %p215, %s18, 1
        %s217 = smul.addr %s216, 8
        %s218 = scalar_lea.vmem %s1, %s217
        %p219 = scmp.lt.s32.totalorder %s18, 1
        %s220 = scalar_select %p219, %s18, 1
        %s221 = smul.addr %s220, 8
        %s222 = scalar_lea.vmem %s2, %s221
        %p223 = scmp.lt.s32.totalorder %s18, 1
        %s224 = scalar_select %p223, %s18, 1
        %s225 = smul.addr %s224, 8
        %s226 = scalar_lea.vmem %s3, %s225
        %v227 = vld [vmem:[%s226] sm:$0xff]
        %v228 = vld [vmem:[%s0] sm:$0x3]
        %v229 = vld [vmem:[%s218] sm:$0xff]
        %v230 = vld [vmem:[%s222] sm:$0xff]
        %v231 = vperm.slane %v228, 0
        %v232 = vmul.f32 %v227, %v231
        %233 = vadd.xlane.f32.xlu0 %v232
        %v234 = vpop.xlane.xlu0 %233
        %v235 = vmul.f32 %v234, 0.015625
        %237 = vset.pattern.permute.xlu0 0
        %238 = vperm.xlu0 %237, %v230
        %v239 = vpop.permute.xlu0 %238
        %v241 = vmul.f32 %v231, %v239
        %v242 = vadd.f32 %v241, 0.0
        %v243 = vsub.f32 %v229, %v230
        %v244 = vmul.f32 %v235, %v243
        %246 = vset.pattern.permute.xlu0 0
        %247 = vperm.xlu0 %246, %v244
        %v248 = vpop.permute.xlu0 %247
        %v250 = vmul.f32 %v231, %v248
        %v251 = vadd.f32 %v250, 0.0
        %v252 = vperm.slane %v228, 1
        %v253 = vmul.f32 %v227, %v252
        %254 = vadd.xlane.f32.xlu0 %v253
        %v255 = vpop.xlane.xlu0 %254
        %v256 = vmul.f32 %v255, 0.015625
        %257 = vset.pattern.permute.xlu0 1
        %258 = vperm.xlu0 %257, %v230
        %v259 = vpop.permute.xlu0 %258
        %v261 = vmul.f32 %v252, %v259
        %v262 = vadd.f32 %v242, %v261
        %v263 = vmul.f32 %v256, %v243
        %265 = vset.pattern.permute.xlu0 1
        %266 = vperm.xlu0 %265, %v263
        %v267 = vpop.permute.xlu0 %266
        %v269 = vmul.f32 %v252, %v267
        %v270 = vadd.f32 %v251, %v269
        %v271 = vmul.f32 %v227, %v262
        %v272 = vadd.f32 %v271, %v270
        %273 = vst [vmem:[%s214] sm:$0xff] %v272
        %s274 = sand.u32 %s125, 1
        %s275 = scalar_lea.sflag [#allocation3], %s274
        %s276 = sand.u32 %s125, 1
        %s277 = smul.addr %s276, 8
        %s278 = scalar_lea.vmem [#allocation2], %s277
        // Predicated region
        $region37: #{tpu_custom_call.1} parent=35 // pred_check
          %p279 = pneg %p135
        $region38: #{tpu_custom_call.1} parent=35 // pred_check_branch
          %281 = sbr.rel (%p279) target = $region40
        $region39: #{tpu_custom_call.1} parent=35 // pred_region
          %283 = vsyncadd %s275, 0
          %s284 = smul.addr %s18, 8
          %s285 = scalar_lea.hbm %s4, %s284
          %s287 = sshll.u32 %s278, 4
          %s288 = int_to_ptr.vmem [resolvable:$true] %s287
          %s289 = sshll.u32 %s285, 4
          %s290 = int_to_ptr.hbm [resolvable:$true] %s289
          %292 = dma.vmem_to_hbm [thread:$0]  %s288, 128, %s290, %s275
        $region40: #{tpu_custom_call.1} parent=35 // pred_fallthru
          _
      $region36: #{tpu_custom_call.1} parent=5 // pred_fallthru
        _
      %p293 = scmp.le.s32.totalorder 2, %s13
      // Predicated region
      $region41: #{tpu_custom_call.1} parent=5 // pred_check
        %p294 = pneg %p293
      $region42: #{tpu_custom_call.1} parent=5 // pred_check_branch
        %296 = sbr.rel (%p294) target = $region44
      $region43: #{tpu_custom_call.1} parent=5 // pred_region
        %s297 = ssub.s32 %s13, 2
        // Predicated region
        $region45: #{tpu_custom_call.1} parent=43 // pred_check
          %p298 = pneg %p141
        $region46: #{tpu_custom_call.1} parent=43 // pred_check_branch
          %300 = sbr.rel (%p298) target = $region48
        $region47: #{tpu_custom_call.1} parent=43 // pred_region
          %s301 = sand.u32 %s126, 1
          %s302 = scalar_lea.sflag [#allocation3], %s301
          %s303 = sand.u32 %s126, 1
          %s304 = smul.addr %s303, 8
          %s305 = scalar_lea.vmem [#allocation2], %s304
          %307 = dma.done %s302, 128
        $region48: #{tpu_custom_call.1} parent=43 // pred_fallthru
          _
      $region44: #{tpu_custom_call.1} parent=5 // pred_fallthru
        _
    $region6: #{tpu_custom_call.1} parent=1 // loop_footer
      %s17 = sadd.s32 1, %s13
    $region7: #{tpu_custom_call.1} parent=1 // loop_footer_branch
      %12 = sbr.rel target = $region3
    $region8: #{tpu_custom_call.1} parent=1 // loop_exit
      _
    %308 = vsyncpa [#allocation3], 1
    %s309 = scalar_lea.sflag [#allocation3], 1
    %310 = vsyncpa %s309, 1

</llo_original>
